<compile_context>
chip_gen: v7x
topology: tpu7x:2x2x1
jax: 0.10.0
libtpu: 0.0.40
codegen_flags: <defaults>
</compile_context>

<pallas_src>
import functools

import jax
import jax.numpy as jnp
from jax.experimental import pallas as pl
from jax.experimental.pallas import tpu as pltpu

IN_FEATURES = 90
N_UNITS_L0 = 600
N_UNITS_L1 = 300

_LANE = 128
_SUBLANE = 8


def _round_up(n, m):
    return ((n + m - 1) // m) * m


def _gelu_exact(x):
    # PyTorch nn.GELU() default: exact erf-based GELU.
    return 0.5 * x * (1.0 + jax.lax.erf(x * 0.7071067811865476))


def _mlp_kernel(x_ref, w1_ref, b1_ref, w2_ref, b2_ref, o_ref):
    """Fused 2-layer MLP: (Linear -> GELU) x 2. Dropout is identity (eval)."""
    x = x_ref[...]  # (bb, fin_p)

    # Layer 0: Linear + GELU (bias broadcasts over rows).
    h = jnp.dot(x, w1_ref[...], preferred_element_type=jnp.float32)
    h = _gelu_exact(h + b1_ref[...])
    # TODO(synk): Dropout(p=0.1) omitted — forward implemented in eval mode.

    # Layer 1: Linear + GELU.
    h2 = jnp.dot(h, w2_ref[...], preferred_element_type=jnp.float32)
    h2 = _gelu_exact(h2 + b2_ref[...])

    o_ref[...] = h2.astype(o_ref.dtype)


@functools.partial(jax.jit, static_argnames=("block_b",))
def single_wvf_encoder_forward(x, w1, b1, w2, b2, *, block_b=512):
    """x: (B, 90) f32.  w1: (90, 600), b1: (1, 600), w2: (600, 300), b2: (1, 300)."""
    B, fin = x.shape
    h1 = w1.shape[1]
    h2 = w2.shape[1]

    # Lane-dense padded feature dims (multiples of 128).
    fin_p = _round_up(fin, _LANE)
    h1_p = _round_up(h1, _LANE)
    h2_p = _round_up(h2, _LANE)

    # Batch tile: large enough to feed the MXU / amortize ~0.35us per-step
    # overhead, but never larger than the (sublane-rounded) batch itself.
    bb = min(block_b, _round_up(B, _SUBLANE))
    B_p = _round_up(B, bb)

    x_p = jnp.pad(x, ((0, B_p - B), (0, fin_p - fin)))
    w1_p = jnp.pad(w1, ((0, fin_p - fin), (0, h1_p - h1)))
    b1_p = jnp.pad(b1, ((0, 0), (0, h1_p - h1)))
    w2_p = jnp.pad(w2, ((0, h1_p - h1), (0, h2_p - h2)))
    b2_p = jnp.pad(b2, ((0, 0), (0, h2_p - h2)))

    grid = (B_p // bb,)

    flops = 2 * B_p * (fin_p * h1_p + h1_p * h2_p)
    bytes_accessed = 4 * (
        B_p * fin_p + fin_p * h1_p + h1_p + h1_p * h2_p + h2_p + B_p * h2_p
    )

    out_p = pl.pallas_call(
        _mlp_kernel,
        out_shape=jax.ShapeDtypeStruct((B_p, h2_p), jnp.float32),
        grid_spec=pl.GridSpec(
            grid=grid,
            in_specs=[
                pl.BlockSpec((bb, fin_p), lambda i: (i, 0)),     # x tile per batch block
                pl.BlockSpec((fin_p, h1_p), lambda i: (0, 0)),   # W1 (VMEM-resident)
                pl.BlockSpec((1, h1_p), lambda i: (0, 0)),       # b1 (VMEM-resident)
                pl.BlockSpec((h1_p, h2_p), lambda i: (0, 0)),    # W2 (VMEM-resident)
                pl.BlockSpec((1, h2_p), lambda i: (0, 0)),       # b2 (VMEM-resident)
            ],
            out_specs=pl.BlockSpec((bb, h2_p), lambda i: (i, 0)),
        ),
        compiler_params=pltpu.CompilerParams(
            dimension_semantics=("parallel",),  # shard batch tiles across TCs (v7x)
        ),
        cost_estimate=pl.CostEstimate(
            flops=flops,
            transcendentals=B_p * (h1_p + h2_p),
            bytes_accessed=bytes_accessed,
        ),
    )(x_p, w1_p, b1_p, w2_p, b2_p)

    return out_p[:B, :h2]


def init_params(key):
    """Deterministic init matching init_weights=True: N(0, 0.001) for W and b."""
    k1, k2, k3, k4 = jax.random.split(key, 4)
    # Stored as (in, out) == PyTorch weight.T
    w1 = 0.001 * jax.random.normal(k1, (IN_FEATURES, N_UNITS_L0), jnp.float32)
    b1 = 0.001 * jax.random.normal(k2, (1, N_UNITS_L0), jnp.float32)
    w2 = 0.001 * jax.random.normal(k3, (N_UNITS_L0, N_UNITS_L1), jnp.float32)
    b2 = 0.001 * jax.random.normal(k4, (1, N_UNITS_L1), jnp.float32)
    return w1, b1, w2, b2


def reference_forward(x, w1, b1, w2, b2):
    h = jax.nn.gelu(x @ w1 + b1, approximate=False)
    h = jax.nn.gelu(h @ w2 + b2, approximate=False)
    return h


if __name__ == "__main__":
    key = jax.random.PRNGKey(0)
    kp, kx = jax.random.split(key)
    w1, b1, w2, b2 = init_params(kp)

    # Small, non-multiple-of-8 batch to exercise the padding/slicing path.
    batch = 13
    x = jax.random.normal(kx, (batch, IN_FEATURES), jnp.float32)

    out = single_wvf_encoder_forward(x, w1, b1, w2, b2)
    out = jax.block_until_ready(out)

    ref = reference_forward(x, w1, b1, w2, b2)
    assert out.shape == (batch, N_UNITS_L1)
    assert jnp.allclose(out, ref, atol=1e-5, rtol=1e-5)

    print("KERNEL_OK")
</pallas_src>

<mosaic_0001>
module attributes {stable_mosaic.version = 11 : i64} {
  func.func @_mlp_kernel(%arg0: i32, %arg1: memref<16x128xf32, #tpu.memory_space<vmem>>, %arg2: memref<128x640xf32, #tpu.memory_space<vmem>>, %arg3: memref<1x640xf32, #tpu.memory_space<vmem>>, %arg4: memref<640x384xf32, #tpu.memory_space<vmem>>, %arg5: memref<1x384xf32, #tpu.memory_space<vmem>>, %arg6: memref<16x384xf32, #tpu.memory_space<vmem>>) attributes {dimension_semantics = [#tpu.dimension_semantics<parallel>], iteration_bounds = array<i64: 1>, scalar_prefetch = 0 : i64, scratch_operands = 0 : i64, tpu.core_type = #tpu.core_type<tc>, window_params = [{transform_indices = @transform_0, window_bounds = array<i64: 16, 128>}, {pipeline_mode = #tpu.pipeline_mode<synchronous>, transform_indices = @transform_1, window_bounds = array<i64: 128, 640>}, {pipeline_mode = #tpu.pipeline_mode<synchronous>, transform_indices = @transform_2, window_bounds = array<i64: 1, 640>}, {pipeline_mode = #tpu.pipeline_mode<synchronous>, transform_indices = @transform_3, window_bounds = array<i64: 640, 384>}, {pipeline_mode = #tpu.pipeline_mode<synchronous>, transform_indices = @transform_4, window_bounds = array<i64: 1, 384>}, {transform_indices = @transform_5, window_bounds = array<i64: 16, 384>}]} {
    %c0 = arith.constant 0 : index
    %c0_0 = arith.constant 0 : index
    %0 = vector.load %arg1[%c0, %c0_0] : memref<16x128xf32, #tpu.memory_space<vmem>>, vector<16x128xf32>
    %c0_1 = arith.constant 0 : index
    %c0_2 = arith.constant 0 : index
    %1 = vector.load %arg2[%c0_1, %c0_2] : memref<128x640xf32, #tpu.memory_space<vmem>>, vector<128x640xf32>
    %cst = arith.constant dense<0.000000e+00> : vector<16x640xf32>
    %2 = tpu.matmul %0, %1, %cst {dimension_numbers = #tpu.dot_dimension_numbers<[1], [0], [0], [1], [0, 0, 1, 1], [], []>} : vector<16x128xf32>, vector<128x640xf32>, vector<16x640xf32> -> vector<16x640xf32>
    %c0_3 = arith.constant 0 : index
    %c0_4 = arith.constant 0 : index
    %3 = vector.load %arg3[%c0_3, %c0_4] : memref<1x640xf32, #tpu.memory_space<vmem>>, vector<1x640xf32>
    %4 = vector.broadcast %3 : vector<1x640xf32> to vector<16x640xf32>
    %5 = arith.addf %2, %4 : vector<16x640xf32>
    %cst_5 = arith.constant 5.000000e-01 : f32
    %6 = vector.broadcast %cst_5 : f32 to vector<16x640xf32>
    %7 = arith.mulf %6, %5 : vector<16x640xf32>
    %cst_6 = arith.constant 0.707106769 : f32
    %8 = vector.broadcast %cst_6 : f32 to vector<16x640xf32>
    %9 = arith.mulf %5, %8 : vector<16x640xf32>
    %10 = math.erf %9 : vector<16x640xf32>
    %cst_7 = arith.constant 1.000000e+00 : f32
    %11 = vector.broadcast %cst_7 : f32 to vector<16x640xf32>
    %12 = arith.addf %11, %10 : vector<16x640xf32>
    %13 = arith.mulf %7, %12 : vector<16x640xf32>
    %c0_8 = arith.constant 0 : index
    %c0_9 = arith.constant 0 : index
    %14 = vector.load %arg4[%c0_8, %c0_9] : memref<640x384xf32, #tpu.memory_space<vmem>>, vector<640x384xf32>
    %cst_10 = arith.constant dense<0.000000e+00> : vector<16x384xf32>
    %15 = tpu.matmul %13, %14, %cst_10 {dimension_numbers = #tpu.dot_dimension_numbers<[1], [0], [0], [1], [0, 0, 1, 1], [], []>} : vector<16x640xf32>, vector<640x384xf32>, vector<16x384xf32> -> vector<16x384xf32>
    %c0_11 = arith.constant 0 : index
    %c0_12 = arith.constant 0 : index
    %16 = vector.load %arg5[%c0_11, %c0_12] : memref<1x384xf32, #tpu.memory_space<vmem>>, vector<1x384xf32>
    %17 = vector.broadcast %16 : vector<1x384xf32> to vector<16x384xf32>
    %18 = arith.addf %15, %17 : vector<16x384xf32>
    %cst_13 = arith.constant 5.000000e-01 : f32
    %19 = vector.broadcast %cst_13 : f32 to vector<16x384xf32>
    %20 = arith.mulf %19, %18 : vector<16x384xf32>
    %cst_14 = arith.constant 0.707106769 : f32
    %21 = vector.broadcast %cst_14 : f32 to vector<16x384xf32>
    %22 = arith.mulf %18, %21 : vector<16x384xf32>
    %23 = math.erf %22 : vector<16x384xf32>
    %cst_15 = arith.constant 1.000000e+00 : f32
    %24 = vector.broadcast %cst_15 : f32 to vector<16x384xf32>
    %25 = arith.addf %24, %23 : vector<16x384xf32>
    %26 = arith.mulf %20, %25 : vector<16x384xf32>
    %c0_16 = arith.constant 0 : index
    %c0_17 = arith.constant 0 : index
    %27 = vector.load %arg6[%c0_16, %c0_17] : memref<16x384xf32, #tpu.memory_space<vmem>>, vector<16x384xf32>
    tpu.vector_store %arg6[%c0_16, %c0_17], %26 {strides = array<i32>} : memref<16x384xf32, #tpu.memory_space<vmem>>, vector<16x384xf32>,
    return
  }
  func.func @transform_0(%arg0: i32) -> (i32, i32) {
    %c0_i32 = arith.constant 0 : i32
    %c0_i32_0 = arith.constant 0 : i32
    return %arg0, %c0_i32 : i32, i32
  }
  func.func @transform_1(%arg0: i32) -> (i32, i32) {
    %c0_i32 = arith.constant 0 : i32
    %c0_i32_0 = arith.constant 0 : i32
    %c0_i32_1 = arith.constant 0 : i32
    return %c0_i32, %c0_i32_0 : i32, i32
  }
  func.func @transform_2(%arg0: i32) -> (i32, i32) {
    %c0_i32 = arith.constant 0 : i32
    %c0_i32_0 = arith.constant 0 : i32
    %c0_i32_1 = arith.constant 0 : i32
    return %c0_i32, %c0_i32_0 : i32, i32
  }
  func.func @transform_3(%arg0: i32) -> (i32, i32) {
    %c0_i32 = arith.constant 0 : i32
    %c0_i32_0 = arith.constant 0 : i32
    %c0_i32_1 = arith.constant 0 : i32
    return %c0_i32, %c0_i32_0 : i32, i32
  }
  func.func @transform_4(%arg0: i32) -> (i32, i32) {
    %c0_i32 = arith.constant 0 : i32
    %c0_i32_0 = arith.constant 0 : i32
    %c0_i32_1 = arith.constant 0 : i32
    return %c0_i32, %c0_i32_0 : i32, i32
  }
  func.func @transform_5(%arg0: i32) -> (i32, i32) {
    %c0_i32 = arith.constant 0 : i32
    %c0_i32_0 = arith.constant 0 : i32
    return %arg0, %c0_i32 : i32, i32
  }
}

</mosaic_0001>

<llo_original>
// kernel: single_wvf_encoder_forward.1
$region0: #{single_wvf_encoder_forward.1}
  #allocation0 [shape = 'u32[]', space=smem, size = 0x4, offset = 0x4, fixed_abs, tag = 'smem constant byte address 0x4 - core index']
  #allocation1 [shape = 'u32[144,128]{1,0:T(1,128)}', space=vmem, size = 0x12000, scoped, tag = 'internal scratch']
  %s0 = inlined_call_operand.vmem [shape: f32[16,128], index: 0, kind: input, shape index: {}]
  %s1 = inlined_call_operand.vmem [shape: f32[128,640], index: 1, kind: input, shape index: {}]
  %s2 = inlined_call_operand.vmem [shape: f32[1,640], index: 2, kind: input, shape index: {}]
  %s3 = inlined_call_operand.vmem [shape: f32[640,384], index: 3, kind: input, shape index: {}]
  %s4 = inlined_call_operand.vmem [shape: f32[1,384], index: 4, kind: input, shape index: {}]
  %s5 = inlined_call_operand.hbm [shape: f32[16,384], index: 5, kind: output, shape index: {}]
  %s6 = sld [smem:[#allocation0]]
  $region30: #{single_wvf_encoder_forward.1} parent=0
    _
  %s8 = ssub.s32 1, %s6
  %s9 = scalar_select 0, %s8, %s6
  $region1: #{single_wvf_encoder_forward.1} parent=0
    #allocation2 [shape = 'u8[24576]{0}', space=vmem, size = 0x6000, scoped, tag = 'output window, operand 0, single buffered']
    #allocation3 [shape = 's32[1]{0}', space=sflag, size = 0x4, scoped, tag = 'scoped memory for single_wvf_encoder_forward.1']
    %10 = vsyncpa [#allocation3], 0
    // Predicated region
    $region2: #{single_wvf_encoder_forward.1} parent=1 // pred_check
      _
    $region3: #{single_wvf_encoder_forward.1} parent=1 // pred_check_branch
      %12 = sbr.rel (0) target = $region5
    $region4: #{single_wvf_encoder_forward.1} parent=1 // pred_region
      _
    $region5: #{single_wvf_encoder_forward.1} parent=1 // pred_fallthru
      _
    // Predicated region
    $region6: #{single_wvf_encoder_forward.1} parent=1 // pred_check
      _
    $region7: #{single_wvf_encoder_forward.1} parent=1 // pred_check_branch
      %14 = sbr.rel (0) target = $region9
    $region8: #{single_wvf_encoder_forward.1} parent=1 // pred_region
      _
    $region9: #{single_wvf_encoder_forward.1} parent=1 // pred_fallthru
      _
    // Predicated region
    $region10: #{single_wvf_encoder_forward.1} parent=1 // pred_check
      _
    $region11: #{single_wvf_encoder_forward.1} parent=1 // pred_check_branch
      %16 = sbr.rel (0) target = $region13
    $region12: #{single_wvf_encoder_forward.1} parent=1 // pred_region
      _
    $region13: #{single_wvf_encoder_forward.1} parent=1 // pred_fallthru
      _
    // Predicated region
    $region14: #{single_wvf_encoder_forward.1} parent=1 // pred_check
      _
    $region15: #{single_wvf_encoder_forward.1} parent=1 // pred_check_branch
      %18 = sbr.rel (0) target = $region17
    $region16: #{single_wvf_encoder_forward.1} parent=1 // pred_region
      _
    $region17: #{single_wvf_encoder_forward.1} parent=1 // pred_fallthru
      _
    // Predicated region
    $region18: #{single_wvf_encoder_forward.1} parent=1 // pred_check
      _
    $region19: #{single_wvf_encoder_forward.1} parent=1 // pred_check_branch
      %20 = sbr.rel (0) target = $region21
    $region20: #{single_wvf_encoder_forward.1} parent=1 // pred_region
      _
    $region21: #{single_wvf_encoder_forward.1} parent=1 // pred_fallthru
      _
    %v21 = vld [vmem:[%s0] sm:$0xff]
    %v22 = vld [vmem:[%s0 + $0x8] sm:$0xff]
    %v23 = vld [vmem:[%s1] sm:$0xff]
    %v24 = vld [vmem:[%s1 + $0x8] sm:$0xff]
    %v25 = vld [vmem:[%s1 + $0x10] sm:$0xff]
    %v26 = vld [vmem:[%s1 + $0x18] sm:$0xff]
    %v27 = vld [vmem:[%s1 + $0x20] sm:$0xff]
    %v28 = vld [vmem:[%s1 + $0x28] sm:$0xff]
    %v29 = vld [vmem:[%s1 + $0x30] sm:$0xff]
    %v30 = vld [vmem:[%s1 + $0x38] sm:$0xff]
    %v31 = vld [vmem:[%s1 + $0x40] sm:$0xff]
    %v32 = vld [vmem:[%s1 + $0x48] sm:$0xff]
    %v33 = vld [vmem:[%s1 + $0x50] sm:$0xff]
    %v34 = vld [vmem:[%s1 + $0x58] sm:$0xff]
    %v35 = vld [vmem:[%s1 + $0x60] sm:$0xff]
    %v36 = vld [vmem:[%s1 + $0x68] sm:$0xff]
    %v37 = vld [vmem:[%s1 + $0x70] sm:$0xff]
    %v38 = vld [vmem:[%s1 + $0x78] sm:$0xff]
    %v39 = vld [vmem:[%s1 + $0x80] sm:$0xff]
    %v40 = vld [vmem:[%s1 + $0x88] sm:$0xff]
    %v41 = vld [vmem:[%s1 + $0x90] sm:$0xff]
    %v42 = vld [vmem:[%s1 + $0x98] sm:$0xff]
    %v43 = vld [vmem:[%s1 + $0xa0] sm:$0xff]
    %v44 = vld [vmem:[%s1 + $0xa8] sm:$0xff]
    %v45 = vld [vmem:[%s1 + $0xb0] sm:$0xff]
    %v46 = vld [vmem:[%s1 + $0xb8] sm:$0xff]
    %v47 = vld [vmem:[%s1 + $0xc0] sm:$0xff]
    %v48 = vld [vmem:[%s1 + $0xc8] sm:$0xff]
    %v49 = vld [vmem:[%s1 + $0xd0] sm:$0xff]
    %v50 = vld [vmem:[%s1 + $0xd8] sm:$0xff]
    %v51 = vld [vmem:[%s1 + $0xe0] sm:$0xff]
    %v52 = vld [vmem:[%s1 + $0xe8] sm:$0xff]
    %v53 = vld [vmem:[%s1 + $0xf0] sm:$0xff]
    %v54 = vld [vmem:[%s1 + $0xf8] sm:$0xff]
    %v55 = vld [vmem:[%s1 + $0x100] sm:$0xff]
    %v56 = vld [vmem:[%s1 + $0x108] sm:$0xff]
    %v57 = vld [vmem:[%s1 + $0x110] sm:$0xff]
    %v58 = vld [vmem:[%s1 + $0x118] sm:$0xff]
    %v59 = vld [vmem:[%s1 + $0x120] sm:$0xff]
    %v60 = vld [vmem:[%s1 + $0x128] sm:$0xff]
    %v61 = vld [vmem:[%s1 + $0x130] sm:$0xff]
    %v62 = vld [vmem:[%s1 + $0x138] sm:$0xff]
    %v63 = vld [vmem:[%s1 + $0x140] sm:$0xff]
    %v64 = vld [vmem:[%s1 + $0x148] sm:$0xff]
    %v65 = vld [vmem:[%s1 + $0x150] sm:$0xff]
    %v66 = vld [vmem:[%s1 + $0x158] sm:$0xff]
    %v67 = vld [vmem:[%s1 + $0x160] sm:$0xff]
    %v68 = vld [vmem:[%s1 + $0x168] sm:$0xff]
    %v69 = vld [vmem:[%s1 + $0x170] sm:$0xff]
    %v70 = vld [vmem:[%s1 + $0x178] sm:$0xff]
    %v71 = vld [vmem:[%s1 + $0x180] sm:$0xff]
    %v72 = vld [vmem:[%s1 + $0x188] sm:$0xff]
    %v73 = vld [vmem:[%s1 + $0x190] sm:$0xff]
    %v74 = vld [vmem:[%s1 + $0x198] sm:$0xff]
    %v75 = vld [vmem:[%s1 + $0x1a0] sm:$0xff]
    %v76 = vld [vmem:[%s1 + $0x1a8] sm:$0xff]
    %v77 = vld [vmem:[%s1 + $0x1b0] sm:$0xff]
    %v78 = vld [vmem:[%s1 + $0x1b8] sm:$0xff]
    %v79 = vld [vmem:[%s1 + $0x1c0] sm:$0xff]
    %v80 = vld [vmem:[%s1 + $0x1c8] sm:$0xff]
    %v81 = vld [vmem:[%s1 + $0x1d0] sm:$0xff]
    %v82 = vld [vmem:[%s1 + $0x1d8] sm:$0xff]
    %v83 = vld [vmem:[%s1 + $0x1e0] sm:$0xff]
    %v84 = vld [vmem:[%s1 + $0x1e8] sm:$0xff]
    %v85 = vld [vmem:[%s1 + $0x1f0] sm:$0xff]
    %v86 = vld [vmem:[%s1 + $0x1f8] sm:$0xff]
    %v87 = vld [vmem:[%s1 + $0x200] sm:$0xff]
    %v88 = vld [vmem:[%s1 + $0x208] sm:$0xff]
    %v89 = vld [vmem:[%s1 + $0x210] sm:$0xff]
    %v90 = vld [vmem:[%s1 + $0x218] sm:$0xff]
    %v91 = vld [vmem:[%s1 + $0x220] sm:$0xff]
    %v92 = vld [vmem:[%s1 + $0x228] sm:$0xff]
    %v93 = vld [vmem:[%s1 + $0x230] sm:$0xff]
    %v94 = vld [vmem:[%s1 + $0x238] sm:$0xff]
    %v95 = vld [vmem:[%s1 + $0x240] sm:$0xff]
    %v96 = vld [vmem:[%s1 + $0x248] sm:$0xff]
    %v97 = vld [vmem:[%s1 + $0x250] sm:$0xff]
    %v98 = vld [vmem:[%s1 + $0x258] sm:$0xff]
    %v99 = vld [vmem:[%s1 + $0x260] sm:$0xff]
    %v100 = vld [vmem:[%s1 + $0x268] sm:$0xff]
    %v101 = vld [vmem:[%s1 + $0x270] sm:$0xff]
    %v102 = vld [vmem:[%s1 + $0x278] sm:$0xff]
    %v103 = vld [vmem:[%s2] sm:$0x1f]
    %v105 = vlaneseq
    %v106 = vshrl.u32 %v105, 7
    %v107 = vsub.s32 0, %v106
    %v108 = vrot.slane %v103, %v107
    %v109 = vlaneseq
    %v110 = vshrl.u32 %v109, 7
    %v111 = vsub.s32 1, %v110
    %v112 = vrot.slane %v103, %v111
    %v113 = vlaneseq
    %v114 = vshrl.u32 %v113, 7
    %v115 = vsub.s32 2, %v114
    %v116 = vrot.slane %v103, %v115
    %v117 = vlaneseq
    %v118 = vshrl.u32 %v117, 7
    %v119 = vsub.s32 3, %v118
    %v120 = vrot.slane %v103, %v119
    %v121 = vlaneseq
    %v122 = vshrl.u32 %v121, 7
    %v123 = vsub.s32 4, %v122
    %v124 = vrot.slane %v103, %v123
    %130 = vmatprep.subr.mxu0 %v24
    %131 = vmatpush1.msra.mxu0 %v23
    %132 = vmatprep.subr.mxu0 %v29
    %133 = vmatpush1.msra.mxu0 %v28
    %134 = vmatprep.subr.mxu0 %v34
    %135 = vmatpush1.msra.mxu0 %v33
    %136 = vmatprep.subr.mxu0 %v39
    %137 = vmatpush1.msra.mxu0 %v38
    %138 = vmatprep.subr.mxu0 %v44
    %139 = vmatpush1.msra.mxu0 %v43
    %140 = vmatprep.subr.mxu0 %v49
    %141 = vmatpush1.msra.mxu0 %v48
    %142 = vmatprep.subr.mxu0 %v54
    %143 = vmatpush1.msra.mxu0 %v53
    %144 = vmatprep.subr.mxu0 %v59
    %145 = vmatpush1.msra.mxu0 %v58
    %146 = vmatprep.subr.mxu0 %v64
    %147 = vmatpush1.msra.mxu0 %v63
    %148 = vmatprep.subr.mxu0 %v69
    %149 = vmatpush1.msra.mxu0 %v68
    %150 = vmatprep.subr.mxu0 %v74
    %151 = vmatpush1.msra.mxu0 %v73
    %152 = vmatprep.subr.mxu0 %v79
    %153 = vmatpush1.msra.mxu0 %v78
    %154 = vmatprep.subr.mxu0 %v84
    %155 = vmatpush1.msra.mxu0 %v83
    %156 = vmatprep.subr.mxu0 %v89
    %157 = vmatpush1.msra.mxu0 %v88
    %158 = vmatprep.subr.mxu0 %v94
    %159 = vmatpush1.msra.mxu0 %v93
    %160 = vmatprep.subr.mxu0 %v99
    %161 = vmatpush1.msra.mxu0 %v98
    %162 = vmatprep.subr.mxu0 0.0
    %163 = vmatpush1.msra.mxu0 0.0
    %164 = vmatprep.subr.mxu0 0.0
    %165 = vmatpush1.msra.mxu0 0.0
    %166 = vmatprep.subr.mxu0 0.0
    %167 = vmatpush1.msra.mxu0 0.0
    %168 = vmatprep.subr.mxu0 0.0
    %169 = vmatpush1.msra.mxu0 0.0
    %170 = vmatprep.subr.mxu0 0.0
    %171 = vmatpush1.msra.mxu0 0.0
    %172 = vmatprep.subr.mxu0 0.0
    %173 = vmatpush1.msra.mxu0 0.0
    %174 = vmatprep.subr.mxu0 0.0
    %175 = vmatpush1.msra.mxu0 0.0
    %176 = vmatprep.subr.mxu0 0.0
    %177 = vmatpush1.msra.mxu0 0.0
    %178 = vmatprep.subr.mxu0 0.0
    %179 = vmatpush1.msra.mxu0 0.0
    %180 = vmatprep.subr.mxu0 0.0
    %181 = vmatpush1.msra.mxu0 0.0
    %182 = vmatprep.subr.mxu0 0.0
    %183 = vmatpush1.msra.mxu0 0.0
    %184 = vmatprep.subr.mxu0 0.0
    %185 = vmatpush1.msra.mxu0 0.0
    %186 = vmatprep.subr.mxu0 0.0
    %187 = vmatpush1.msra.mxu0 0.0
    %188 = vmatprep.subr.mxu0 0.0
    %189 = vmatpush1.msra.mxu0 0.0
    %190 = vmatprep.subr.mxu0 0.0
    %191 = vmatpush1.msra.mxu0 0.0
    %192 = vmatprep.subr.mxu0 0.0
    %193 = vmatpush1.msra.mxu0 0.0
    %194 = vmatprep.mubr.f32.mxu0 0.0
    %195 = vmatmul.mubr.f32.gmra.mrb[0].mxu0 %v21
    %v196 = vpop.f32.mrb[0].mxu0
    %v197 = vadd.f32 %v108, %v196
    %v198 = vpop.f32.mrb[0].mxu0
    %v199 = vadd.f32 %v112, %v198
    %200 = vmatprep.mubr.f32.mxu0 0.0
    %201 = vmatmul.mubr.f32.gmra.mrb[0].mxu0 %v22
    %v202 = vpop.f32.mrb[0].mxu0
    %v203 = vadd.f32 %v108, %v202
    %v204 = vpop.f32.mrb[0].mxu0
    %v205 = vadd.f32 %v112, %v204
    %206 = vdwg.mxu0
    %207 = vmatprep.subr.mxu0 %v26
    %208 = vmatpush1.msra.mxu0 %v25
    %209 = vmatprep.subr.mxu0 %v31
    %210 = vmatpush1.msra.mxu0 %v30
    %211 = vmatprep.subr.mxu0 %v36
    %212 = vmatpush1.msra.mxu0 %v35
    %213 = vmatprep.subr.mxu0 %v41
    %214 = vmatpush1.msra.mxu0 %v40
    %215 = vmatprep.subr.mxu0 %v46
    %216 = vmatpush1.msra.mxu0 %v45
    %217 = vmatprep.subr.mxu0 %v51
    %218 = vmatpush1.msra.mxu0 %v50
    %219 = vmatprep.subr.mxu0 %v56
    %220 = vmatpush1.msra.mxu0 %v55
    %221 = vmatprep.subr.mxu0 %v61
    %222 = vmatpush1.msra.mxu0 %v60
    %223 = vmatprep.subr.mxu0 %v66
    %224 = vmatpush1.msra.mxu0 %v65
    %225 = vmatprep.subr.mxu0 %v71
    %226 = vmatpush1.msra.mxu0 %v70
    %227 = vmatprep.subr.mxu0 %v76
    %228 = vmatpush1.msra.mxu0 %v75
    %229 = vmatprep.subr.mxu0 %v81
    %230 = vmatpush1.msra.mxu0 %v80
    %231 = vmatprep.subr.mxu0 %v86
    %232 = vmatpush1.msra.mxu0 %v85
    %233 = vmatprep.subr.mxu0 %v91
    %234 = vmatpush1.msra.mxu0 %v90
    %235 = vmatprep.subr.mxu0 %v96
    %236 = vmatpush1.msra.mxu0 %v95
    %237 = vmatprep.subr.mxu0 %v101
    %238 = vmatpush1.msra.mxu0 %v100
    %239 = vmatprep.subr.mxu0 0.0
    %240 = vmatpush1.msra.mxu0 0.0
    %241 = vmatprep.subr.mxu0 0.0
    %242 = vmatpush1.msra.mxu0 0.0
    %243 = vmatprep.subr.mxu0 0.0
    %244 = vmatpush1.msra.mxu0 0.0
    %245 = vmatprep.subr.mxu0 0.0
    %246 = vmatpush1.msra.mxu0 0.0
    %247 = vmatprep.subr.mxu0 0.0
    %248 = vmatpush1.msra.mxu0 0.0
    %249 = vmatprep.subr.mxu0 0.0
    %250 = vmatpush1.msra.mxu0 0.0
    %251 = vmatprep.subr.mxu0 0.0
    %252 = vmatpush1.msra.mxu0 0.0
    %253 = vmatprep.subr.mxu0 0.0
    %254 = vmatpush1.msra.mxu0 0.0
    %255 = vmatprep.subr.mxu0 0.0
    %256 = vmatpush1.msra.mxu0 0.0
    %257 = vmatprep.subr.mxu0 0.0
    %258 = vmatpush1.msra.mxu0 0.0
    %259 = vmatprep.subr.mxu0 0.0
    %260 = vmatpush1.msra.mxu0 0.0
    %261 = vmatprep.subr.mxu0 0.0
    %262 = vmatpush1.msra.mxu0 0.0
    %263 = vmatprep.subr.mxu0 0.0
    %264 = vmatpush1.msra.mxu0 0.0
    %265 = vmatprep.subr.mxu0 0.0
    %266 = vmatpush1.msra.mxu0 0.0
    %267 = vmatprep.subr.mxu0 0.0
    %268 = vmatpush1.msra.mxu0 0.0
    %269 = vmatprep.subr.mxu0 0.0
    %270 = vmatpush1.msra.mxu0 0.0
    %271 = vmatprep.mubr.f32.mxu0 0.0
    %272 = vmatmul.mubr.f32.gmra.mrb[0].mxu0 %v21
    %v273 = vpop.f32.mrb[0].mxu0
    %v274 = vadd.f32 %v116, %v273
    %v275 = vpop.f32.mrb[0].mxu0
    %v276 = vadd.f32 %v120, %v275
    %277 = vmatprep.mubr.f32.mxu0 0.0
    %278 = vmatmul.mubr.f32.gmra.mrb[0].mxu0 %v22
    %v279 = vpop.f32.mrb[0].mxu0
    %v280 = vadd.f32 %v116, %v279
    %v281 = vpop.f32.mrb[0].mxu0
    %v282 = vadd.f32 %v120, %v281
    %283 = vdwg.mxu0
    %284 = vmatprep.subr.mxu0 0.0
    %285 = vmatpush1.msra.mxu0 %v27
    %286 = vmatprep.subr.mxu0 0.0
    %287 = vmatpush1.msra.mxu0 %v32
    %288 = vmatprep.subr.mxu0 0.0
    %289 = vmatpush1.msra.mxu0 %v37
    %290 = vmatprep.subr.mxu0 0.0
    %291 = vmatpush1.msra.mxu0 %v42
    %292 = vmatprep.subr.mxu0 0.0
    %293 = vmatpush1.msra.mxu0 %v47
    %294 = vmatprep.subr.mxu0 0.0
    %295 = vmatpush1.msra.mxu0 %v52
    %296 = vmatprep.subr.mxu0 0.0
    %297 = vmatpush1.msra.mxu0 %v57
    %298 = vmatprep.subr.mxu0 0.0
    %299 = vmatpush1.msra.mxu0 %v62
    %300 = vmatprep.subr.mxu0 0.0
    %301 = vmatpush1.msra.mxu0 %v67
    %302 = vmatprep.subr.mxu0 0.0
    %303 = vmatpush1.msra.mxu0 %v72
    %304 = vmatprep.subr.mxu0 0.0
    %305 = vmatpush1.msra.mxu0 %v77
    %306 = vmatprep.subr.mxu0 0.0
    %307 = vmatpush1.msra.mxu0 %v82
    %308 = vmatprep.subr.mxu0 0.0
    %309 = vmatpush1.msra.mxu0 %v87
    %310 = vmatprep.subr.mxu0 0.0
    %311 = vmatpush1.msra.mxu0 %v92
    %312 = vmatprep.subr.mxu0 0.0
    %313 = vmatpush1.msra.mxu0 %v97
    %314 = vmatprep.subr.mxu0 0.0
    %315 = vmatpush1.msra.mxu0 %v102
    %316 = vmatprep.subr.mxu0 0.0
    %317 = vmatpush1.msra.mxu0 0.0
    %318 = vmatprep.subr.mxu0 0.0
    %319 = vmatpush1.msra.mxu0 0.0
    %320 = vmatprep.subr.mxu0 0.0
    %321 = vmatpush1.msra.mxu0 0.0
    %322 = vmatprep.subr.mxu0 0.0
    %323 = vmatpush1.msra.mxu0 0.0
    %324 = vmatprep.subr.mxu0 0.0
    %325 = vmatpush1.msra.mxu0 0.0
    %326 = vmatprep.subr.mxu0 0.0
    %327 = vmatpush1.msra.mxu0 0.0
    %328 = vmatprep.subr.mxu0 0.0
    %329 = vmatpush1.msra.mxu0 0.0
    %330 = vmatprep.subr.mxu0 0.0
    %331 = vmatpush1.msra.mxu0 0.0
    %332 = vmatprep.subr.mxu0 0.0
    %333 = vmatpush1.msra.mxu0 0.0
    %334 = vmatprep.subr.mxu0 0.0
    %335 = vmatpush1.msra.mxu0 0.0
    %336 = vmatprep.subr.mxu0 0.0
    %337 = vmatpush1.msra.mxu0 0.0
    %338 = vmatprep.subr.mxu0 0.0
    %339 = vmatpush1.msra.mxu0 0.0
    %340 = vmatprep.subr.mxu0 0.0
    %341 = vmatpush1.msra.mxu0 0.0
    %342 = vmatprep.subr.mxu0 0.0
    %343 = vmatpush1.msra.mxu0 0.0
    %344 = vmatprep.subr.mxu0 0.0
    %345 = vmatpush1.msra.mxu0 0.0
    %346 = vmatprep.subr.mxu0 0.0
    %347 = vmatpush1.msra.mxu0 0.0
    %348 = vmatprep.mubr.f32.mxu0 0.0
    %349 = vmatmul.mubr.f32.gmra.mrb[0].mxu0 %v21
    %v350 = vpop.f32.mrb[0].mxu0
    %v351 = vadd.f32 %v124, %v350
    %v352 = vpop.f32.mrb[0].mxu0
    %353 = vmatprep.mubr.f32.mxu0 0.0
    %354 = vmatmul.mubr.f32.gmra.mrb[0].mxu0 %v22
    %v355 = vpop.f32.mrb[0].mxu0
    %v356 = vadd.f32 %v124, %v355
    %v357 = vpop.f32.mrb[0].mxu0
    %358 = vdwg.mxu0
    %v359 = vmul.f32 %v197, 0.5
    %v360 = vmul.f32 %v199, 0.5
    %v361 = vmul.f32 %v274, 0.5
    %v362 = vmul.f32 %v276, 0.5
    %v363 = vmul.f32 %v351, 0.5
    %v364 = vmul.f32 %v203, 0.5
    %v365 = vmul.f32 %v205, 0.5
    %v366 = vmul.f32 %v280, 0.5
    %v367 = vmul.f32 %v282, 0.5
    %v368 = vmul.f32 %v356, 0.5
    %v369 = vmul.f32 %v197, 0.70710677
    %v370 = vmul.f32 %v199, 0.70710677
    %v371 = vmul.f32 %v274, 0.70710677
    %v372 = vmul.f32 %v276, 0.70710677
    %v373 = vmul.f32 %v351, 0.70710677
    %v374 = vmul.f32 %v203, 0.70710677
    %v375 = vmul.f32 %v205, 0.70710677
    %v376 = vmul.f32 %v280, 0.70710677
    %v377 = vmul.f32 %v282, 0.70710677
    %v378 = vmul.f32 %v356, 0.70710677
    %v379 = verf.f32.pop %v369
    %v380 = verf.f32.pop %v370
    %v381 = verf.f32.pop %v371
    %v382 = verf.f32.pop %v372
    %v383 = verf.f32.pop %v373
    %v384 = verf.f32.pop %v374
    %v385 = verf.f32.pop %v375
    %v386 = verf.f32.pop %v376
    %v387 = verf.f32.pop %v377
    %v388 = verf.f32.pop %v378
    %v389 = vadd.f32 %v379, 1.0
    %v390 = vadd.f32 %v380, 1.0
    %v391 = vadd.f32 %v381, 1.0
    %v392 = vadd.f32 %v382, 1.0
    %v393 = vadd.f32 %v383, 1.0
    %v394 = vadd.f32 %v384, 1.0
    %v395 = vadd.f32 %v385, 1.0
    %v396 = vadd.f32 %v386, 1.0
    %v397 = vadd.f32 %v387, 1.0
    %v398 = vadd.f32 %v388, 1.0
    %v399 = vmul.f32 %v359, %v389
    %v400 = vmul.f32 %v360, %v390
    %v401 = vmul.f32 %v361, %v391
    %v402 = vmul.f32 %v362, %v392
    %v403 = vmul.f32 %v363, %v393
    %v404 = vmul.f32 %v364, %v394
    %v405 = vmul.f32 %v365, %v395
    %v406 = vmul.f32 %v366, %v396
    %v407 = vmul.f32 %v367, %v397
    %v408 = vmul.f32 %v368, %v398
    %v409 = vld [vmem:[%s3] sm:$0xff]
    %v410 = vld [vmem:[%s3 + $0x8] sm:$0xff]
    %v411 = vld [vmem:[%s3 + $0x10] sm:$0xff]
    %v412 = vld [vmem:[%s3 + $0x18] sm:$0xff]
    %v413 = vld [vmem:[%s3 + $0x20] sm:$0xff]
    %v414 = vld [vmem:[%s3 + $0x28] sm:$0xff]
    %v415 = vld [vmem:[%s3 + $0x30] sm:$0xff]
    %v416 = vld [vmem:[%s3 + $0x38] sm:$0xff]
    %v417 = vld [vmem:[%s3 + $0x40] sm:$0xff]
    %v418 = vld [vmem:[%s3 + $0x48] sm:$0xff]
    %v419 = vld [vmem:[%s3 + $0x50] sm:$0xff]
    %v420 = vld [vmem:[%s3 + $0x58] sm:$0xff]
    %v421 = vld [vmem:[%s3 + $0x60] sm:$0xff]
    %v422 = vld [vmem:[%s3 + $0x68] sm:$0xff]
    %v423 = vld [vmem:[%s3 + $0x70] sm:$0xff]
    %v424 = vld [vmem:[%s3 + $0x78] sm:$0xff]
    %v425 = vld [vmem:[%s3 + $0x80] sm:$0xff]
    %v426 = vld [vmem:[%s3 + $0x88] sm:$0xff]
    %v427 = vld [vmem:[%s3 + $0x90] sm:$0xff]
    %v428 = vld [vmem:[%s3 + $0x98] sm:$0xff]
    %v429 = vld [vmem:[%s3 + $0xa0] sm:$0xff]
    %v430 = vld [vmem:[%s3 + $0xa8] sm:$0xff]
    %v431 = vld [vmem:[%s3 + $0xb0] sm:$0xff]
    %v432 = vld [vmem:[%s3 + $0xb8] sm:$0xff]
    %v433 = vld [vmem:[%s3 + $0xc0] sm:$0xff]
    %v434 = vld [vmem:[%s3 + $0xc8] sm:$0xff]
    %v435 = vld [vmem:[%s3 + $0xd0] sm:$0xff]
    %v436 = vld [vmem:[%s3 + $0xd8] sm:$0xff]
    %v437 = vld [vmem:[%s3 + $0xe0] sm:$0xff]
    %v438 = vld [vmem:[%s3 + $0xe8] sm:$0xff]
    %v439 = vld [vmem:[%s3 + $0xf0] sm:$0xff]
    %v440 = vld [vmem:[%s3 + $0xf8] sm:$0xff]
    %v441 = vld [vmem:[%s3 + $0x100] sm:$0xff]
    %v442 = vld [vmem:[%s3 + $0x108] sm:$0xff]
    %v443 = vld [vmem:[%s3 + $0x110] sm:$0xff]
    %v444 = vld [vmem:[%s3 + $0x118] sm:$0xff]
    %v445 = vld [vmem:[%s3 + $0x120] sm:$0xff]
    %v446 = vld [vmem:[%s3 + $0x128] sm:$0xff]
    %v447 = vld [vmem:[%s3 + $0x130] sm:$0xff]
    %v448 = vld [vmem:[%s3 + $0x138] sm:$0xff]
    %v449 = vld [vmem:[%s3 + $0x140] sm:$0xff]
    %v450 = vld [vmem:[%s3 + $0x148] sm:$0xff]
    %v451 = vld [vmem:[%s3 + $0x150] sm:$0xff]
    %v452 = vld [vmem:[%s3 + $0x158] sm:$0xff]
    %v453 = vld [vmem:[%s3 + $0x160] sm:$0xff]
    %v454 = vld [vmem:[%s3 + $0x168] sm:$0xff]
    %v455 = vld [vmem:[%s3 + $0x170] sm:$0xff]
    %v456 = vld [vmem:[%s3 + $0x178] sm:$0xff]
    %v457 = vld [vmem:[%s3 + $0x180] sm:$0xff]
    %v458 = vld [vmem:[%s3 + $0x188] sm:$0xff]
    %v459 = vld [vmem:[%s3 + $0x190] sm:$0xff]
    %v460 = vld [vmem:[%s3 + $0x198] sm:$0xff]
    %v461 = vld [vmem:[%s3 + $0x1a0] sm:$0xff]
    %v462 = vld [vmem:[%s3 + $0x1a8] sm:$0xff]
    %v463 = vld [vmem:[%s3 + $0x1b0] sm:$0xff]
    %v464 = vld [vmem:[%s3 + $0x1b8] sm:$0xff]
    %v465 = vld [vmem:[%s3 + $0x1c0] sm:$0xff]
    %v466 = vld [vmem:[%s3 + $0x1c8] sm:$0xff]
    %v467 = vld [vmem:[%s3 + $0x1d0] sm:$0xff]
    %v468 = vld [vmem:[%s3 + $0x1d8] sm:$0xff]
    %v469 = vld [vmem:[%s3 + $0x1e0] sm:$0xff]
    %v470 = vld [vmem:[%s3 + $0x1e8] sm:$0xff]
    %v471 = vld [vmem:[%s3 + $0x1f0] sm:$0xff]
    %v472 = vld [vmem:[%s3 + $0x1f8] sm:$0xff]
    %v473 = vld [vmem:[%s3 + $0x200] sm:$0xff]
    %v474 = vld [vmem:[%s3 + $0x208] sm:$0xff]
    %v475 = vld [vmem:[%s3 + $0x210] sm:$0xff]
    %v476 = vld [vmem:[%s3 + $0x218] sm:$0xff]
    %v477 = vld [vmem:[%s3 + $0x220] sm:$0xff]
    %v478 = vld [vmem:[%s3 + $0x228] sm:$0xff]
    %v479 = vld [vmem:[%s3 + $0x230] sm:$0xff]
    %v480 = vld [vmem:[%s3 + $0x238] sm:$0xff]
    %v481 = vld [vmem:[%s3 + $0x240] sm:$0xff]
    %v482 = vld [vmem:[%s3 + $0x248] sm:$0xff]
    %v483 = vld [vmem:[%s3 + $0x250] sm:$0xff]
    %v484 = vld [vmem:[%s3 + $0x258] sm:$0xff]
    %v485 = vld [vmem:[%s3 + $0x260] sm:$0xff]
    %v486 = vld [vmem:[%s3 + $0x268] sm:$0xff]
    %v487 = vld [vmem:[%s3 + $0x270] sm:$0xff]
    %v488 = vld [vmem:[%s3 + $0x278] sm:$0xff]
    %v489 = vld [vmem:[%s3 + $0x280] sm:$0xff]
    %v490 = vld [vmem:[%s3 + $0x288] sm:$0xff]
    %v491 = vld [vmem:[%s3 + $0x290] sm:$0xff]
    %v492 = vld [vmem:[%s3 + $0x298] sm:$0xff]
    %v493 = vld [vmem:[%s3 + $0x2a0] sm:$0xff]
    %v494 = vld [vmem:[%s3 + $0x2a8] sm:$0xff]
    %v495 = vld [vmem:[%s3 + $0x2b0] sm:$0xff]
    %v496 = vld [vmem:[%s3 + $0x2b8] sm:$0xff]
    %v497 = vld [vmem:[%s3 + $0x2c0] sm:$0xff]
    %v498 = vld [vmem:[%s3 + $0x2c8] sm:$0xff]
    %v499 = vld [vmem:[%s3 + $0x2d0] sm:$0xff]
    %v500 = vld [vmem:[%s3 + $0x2d8] sm:$0xff]
    %v501 = vld [vmem:[%s3 + $0x2e0] sm:$0xff]
    %v502 = vld [vmem:[%s3 + $0x2e8] sm:$0xff]
    %v503 = vld [vmem:[%s3 + $0x2f0] sm:$0xff]
    %v504 = vld [vmem:[%s3 + $0x2f8] sm:$0xff]
    %v505 = vld [vmem:[%s3 + $0x300] sm:$0xff]
    %v506 = vld [vmem:[%s3 + $0x308] sm:$0xff]
    %v507 = vld [vmem:[%s3 + $0x310] sm:$0xff]
    %v508 = vld [vmem:[%s3 + $0x318] sm:$0xff]
    %v509 = vld [vmem:[%s3 + $0x320] sm:$0xff]
    %v510 = vld [vmem:[%s3 + $0x328] sm:$0xff]
    %v511 = vld [vmem:[%s3 + $0x330] sm:$0xff]
    %v512 = vld [vmem:[%s3 + $0x338] sm:$0xff]
    %v513 = vld [vmem:[%s3 + $0x340] sm:$0xff]
    %v514 = vld [vmem:[%s3 + $0x348] sm:$0xff]
    %v515 = vld [vmem:[%s3 + $0x350] sm:$0xff]
    %v516 = vld [vmem:[%s3 + $0x358] sm:$0xff]
    %v517 = vld [vmem:[%s3 + $0x360] sm:$0xff]
    %v518 = vld [vmem:[%s3 + $0x368] sm:$0xff]
    %v519 = vld [vmem:[%s3 + $0x370] sm:$0xff]
    %v520 = vld [vmem:[%s3 + $0x378] sm:$0xff]
    %v521 = vld [vmem:[%s3 + $0x380] sm:$0xff]
    %v522 = vld [vmem:[%s3 + $0x388] sm:$0xff]
    %v523 = vld [vmem:[%s3 + $0x390] sm:$0xff]
    %v524 = vld [vmem:[%s3 + $0x398] sm:$0xff]
    %v525 = vld [vmem:[%s3 + $0x3a0] sm:$0xff]
    %v526 = vld [vmem:[%s3 + $0x3a8] sm:$0xff]
    %v527 = vld [vmem:[%s3 + $0x3b0] sm:$0xff]
    %v528 = vld [vmem:[%s3 + $0x3b8] sm:$0xff]
    %v529 = vld [vmem:[%s3 + $0x3c0] sm:$0xff]
    %v530 = vld [vmem:[%s3 + $0x3c8] sm:$0xff]
    %v531 = vld [vmem:[%s3 + $0x3d0] sm:$0xff]
    %v532 = vld [vmem:[%s3 + $0x3d8] sm:$0xff]
    %v533 = vld [vmem:[%s3 + $0x3e0] sm:$0xff]
    %v534 = vld [vmem:[%s3 + $0x3e8] sm:$0xff]
    %v535 = vld [vmem:[%s3 + $0x3f0] sm:$0xff]
    %v536 = vld [vmem:[%s3 + $0x3f8] sm:$0xff]
    %v537 = vld [vmem:[%s3 + $0x400] sm:$0xff]
    %v538 = vld [vmem:[%s3 + $0x408] sm:$0xff]
    %v539 = vld [vmem:[%s3 + $0x410] sm:$0xff]
    %v540 = vld [vmem:[%s3 + $0x418] sm:$0xff]
    %v541 = vld [vmem:[%s3 + $0x420] sm:$0xff]
    %v542 = vld [vmem:[%s3 + $0x428] sm:$0xff]
    %v543 = vld [vmem:[%s3 + $0x430] sm:$0xff]
    %v544 = vld [vmem:[%s3 + $0x438] sm:$0xff]
    %v545 = vld [vmem:[%s3 + $0x440] sm:$0xff]
    %v546 = vld [vmem:[%s3 + $0x448] sm:$0xff]
    %v547 = vld [vmem:[%s3 + $0x450] sm:$0xff]
    %v548 = vld [vmem:[%s3 + $0x458] sm:$0xff]
    %v549 = vld [vmem:[%s3 + $0x460] sm:$0xff]
    %v550 = vld [vmem:[%s3 + $0x468] sm:$0xff]
    %v551 = vld [vmem:[%s3 + $0x470] sm:$0xff]
    %v552 = vld [vmem:[%s3 + $0x478] sm:$0xff]
    %v553 = vld [vmem:[%s3 + $0x480] sm:$0xff]
    %v554 = vld [vmem:[%s3 + $0x488] sm:$0xff]
    %v555 = vld [vmem:[%s3 + $0x490] sm:$0xff]
    %v556 = vld [vmem:[%s3 + $0x498] sm:$0xff]
    %v557 = vld [vmem:[%s3 + $0x4a0] sm:$0xff]
    %v558 = vld [vmem:[%s3 + $0x4a8] sm:$0xff]
    %v559 = vld [vmem:[%s3 + $0x4b0] sm:$0xff]
    %v560 = vld [vmem:[%s3 + $0x4b8] sm:$0xff]
    %v561 = vld [vmem:[%s3 + $0x4c0] sm:$0xff]
    %v562 = vld [vmem:[%s3 + $0x4c8] sm:$0xff]
    %v563 = vld [vmem:[%s3 + $0x4d0] sm:$0xff]
    %v564 = vld [vmem:[%s3 + $0x4d8] sm:$0xff]
    %v565 = vld [vmem:[%s3 + $0x4e0] sm:$0xff]
    %v566 = vld [vmem:[%s3 + $0x4e8] sm:$0xff]
    %v567 = vld [vmem:[%s3 + $0x4f0] sm:$0xff]
    %v568 = vld [vmem:[%s3 + $0x4f8] sm:$0xff]
    %v569 = vld [vmem:[%s3 + $0x500] sm:$0xff]
    %v570 = vld [vmem:[%s3 + $0x508] sm:$0xff]
    %v571 = vld [vmem:[%s3 + $0x510] sm:$0xff]
    %v572 = vld [vmem:[%s3 + $0x518] sm:$0xff]
    %v573 = vld [vmem:[%s3 + $0x520] sm:$0xff]
    %v574 = vld [vmem:[%s3 + $0x528] sm:$0xff]
    %v575 = vld [vmem:[%s3 + $0x530] sm:$0xff]
    %v576 = vld [vmem:[%s3 + $0x538] sm:$0xff]
    %v577 = vld [vmem:[%s3 + $0x540] sm:$0xff]
    %v578 = vld [vmem:[%s3 + $0x548] sm:$0xff]
    %v579 = vld [vmem:[%s3 + $0x550] sm:$0xff]
    %v580 = vld [vmem:[%s3 + $0x558] sm:$0xff]
    %v581 = vld [vmem:[%s3 + $0x560] sm:$0xff]
    %v582 = vld [vmem:[%s3 + $0x568] sm:$0xff]
    %v583 = vld [vmem:[%s3 + $0x570] sm:$0xff]
    %v584 = vld [vmem:[%s3 + $0x578] sm:$0xff]
    %v585 = vld [vmem:[%s3 + $0x580] sm:$0xff]
    %v586 = vld [vmem:[%s3 + $0x588] sm:$0xff]
    %v587 = vld [vmem:[%s3 + $0x590] sm:$0xff]
    %v588 = vld [vmem:[%s3 + $0x598] sm:$0xff]
    %v589 = vld [vmem:[%s3 + $0x5a0] sm:$0xff]
    %v590 = vld [vmem:[%s3 + $0x5a8] sm:$0xff]
    %v591 = vld [vmem:[%s3 + $0x5b0] sm:$0xff]
    %v592 = vld [vmem:[%s3 + $0x5b8] sm:$0xff]
    %v593 = vld [vmem:[%s3 + $0x5c0] sm:$0xff]
    %v594 = vld [vmem:[%s3 + $0x5c8] sm:$0xff]
    %v595 = vld [vmem:[%s3 + $0x5d0] sm:$0xff]
    %v596 = vld [vmem:[%s3 + $0x5d8] sm:$0xff]
    %v597 = vld [vmem:[%s3 + $0x5e0] sm:$0xff]
    %v598 = vld [vmem:[%s3 + $0x5e8] sm:$0xff]
    %v599 = vld [vmem:[%s3 + $0x5f0] sm:$0xff]
    %v600 = vld [vmem:[%s3 + $0x5f8] sm:$0xff]
    %v601 = vld [vmem:[%s3 + $0x600] sm:$0xff]
    %v602 = vld [vmem:[%s3 + $0x608] sm:$0xff]
    %v603 = vld [vmem:[%s3 + $0x610] sm:$0xff]
    %v604 = vld [vmem:[%s3 + $0x618] sm:$0xff]
    %v605 = vld [vmem:[%s3 + $0x620] sm:$0xff]
    %v606 = vld [vmem:[%s3 + $0x628] sm:$0xff]
    %v607 = vld [vmem:[%s3 + $0x630] sm:$0xff]
    %v608 = vld [vmem:[%s3 + $0x638] sm:$0xff]
    %v609 = vld [vmem:[%s3 + $0x640] sm:$0xff]
    %v610 = vld [vmem:[%s3 + $0x648] sm:$0xff]
    %v611 = vld [vmem:[%s3 + $0x650] sm:$0xff]
    %v612 = vld [vmem:[%s3 + $0x658] sm:$0xff]
    %v613 = vld [vmem:[%s3 + $0x660] sm:$0xff]
    %v614 = vld [vmem:[%s3 + $0x668] sm:$0xff]
    %v615 = vld [vmem:[%s3 + $0x670] sm:$0xff]
    %v616 = vld [vmem:[%s3 + $0x678] sm:$0xff]
    %v617 = vld [vmem:[%s3 + $0x680] sm:$0xff]
    %v618 = vld [vmem:[%s3 + $0x688] sm:$0xff]
    %v619 = vld [vmem:[%s3 + $0x690] sm:$0xff]
    %v620 = vld [vmem:[%s3 + $0x698] sm:$0xff]
    %v621 = vld [vmem:[%s3 + $0x6a0] sm:$0xff]
    %v622 = vld [vmem:[%s3 + $0x6a8] sm:$0xff]
    %v623 = vld [vmem:[%s3 + $0x6b0] sm:$0xff]
    %v624 = vld [vmem:[%s3 + $0x6b8] sm:$0xff]
    %v625 = vld [vmem:[%s3 + $0x6c0] sm:$0xff]
    %v626 = vld [vmem:[%s3 + $0x6c8] sm:$0xff]
    %v627 = vld [vmem:[%s3 + $0x6d0] sm:$0xff]
    %v628 = vld [vmem:[%s3 + $0x6d8] sm:$0xff]
    %v629 = vld [vmem:[%s3 + $0x6e0] sm:$0xff]
    %v630 = vld [vmem:[%s3 + $0x6e8] sm:$0xff]
    %v631 = vld [vmem:[%s3 + $0x6f0] sm:$0xff]
    %v632 = vld [vmem:[%s3 + $0x6f8] sm:$0xff]
    %v633 = vld [vmem:[%s3 + $0x700] sm:$0xff]
    %v634 = vld [vmem:[%s3 + $0x708] sm:$0xff]
    %v635 = vld [vmem:[%s3 + $0x710] sm:$0xff]
    %v636 = vld [vmem:[%s3 + $0x718] sm:$0xff]
    %v637 = vld [vmem:[%s3 + $0x720] sm:$0xff]
    %v638 = vld [vmem:[%s3 + $0x728] sm:$0xff]
    %v639 = vld [vmem:[%s3 + $0x730] sm:$0xff]
    %v640 = vld [vmem:[%s3 + $0x738] sm:$0xff]
    %v641 = vld [vmem:[%s3 + $0x740] sm:$0xff]
    %v642 = vld [vmem:[%s3 + $0x748] sm:$0xff]
    %v643 = vld [vmem:[%s3 + $0x750] sm:$0xff]
    %v644 = vld [vmem:[%s3 + $0x758] sm:$0xff]
    %v645 = vld [vmem:[%s3 + $0x760] sm:$0xff]
    %v646 = vld [vmem:[%s3 + $0x768] sm:$0xff]
    %v647 = vld [vmem:[%s3 + $0x770] sm:$0xff]
    %v648 = vld [vmem:[%s3 + $0x778] sm:$0xff]
    %v649 = vld [vmem:[%s4] sm:$0x7]
    %v651 = vlaneseq
    %v652 = vshrl.u32 %v651, 7
    %v653 = vsub.s32 0, %v652
    %v654 = vrot.slane %v649, %v653
    %v655 = vlaneseq
    %v656 = vshrl.u32 %v655, 7
    %v657 = vsub.s32 1, %v656
    %v658 = vrot.slane %v649, %v657
    %v659 = vlaneseq
    %v660 = vshrl.u32 %v659, 7
    %v661 = vsub.s32 2, %v660
    %v662 = vrot.slane %v649, %v661
    %666 = vmatprep.subr.mxu0 %v410
    %667 = vmatpush1.msra.mxu0 %v409
    %668 = vmatprep.subr.mxu0 %v413
    %669 = vmatpush1.msra.mxu0 %v412
    %670 = vmatprep.subr.mxu0 %v416
    %671 = vmatpush1.msra.mxu0 %v415
    %672 = vmatprep.subr.mxu0 %v419
    %673 = vmatpush1.msra.mxu0 %v418
    %674 = vmatprep.subr.mxu0 %v422
    %675 = vmatpush1.msra.mxu0 %v421
    %676 = vmatprep.subr.mxu0 %v425
    %677 = vmatpush1.msra.mxu0 %v424
    %678 = vmatprep.subr.mxu0 %v428
    %679 = vmatpush1.msra.mxu0 %v427
    %680 = vmatprep.subr.mxu0 %v431
    %681 = vmatpush1.msra.mxu0 %v430
    %682 = vmatprep.subr.mxu0 %v434
    %683 = vmatpush1.msra.mxu0 %v433
    %684 = vmatprep.subr.mxu0 %v437
    %685 = vmatpush1.msra.mxu0 %v436
    %686 = vmatprep.subr.mxu0 %v440
    %687 = vmatpush1.msra.mxu0 %v439
    %688 = vmatprep.subr.mxu0 %v443
    %689 = vmatpush1.msra.mxu0 %v442
    %690 = vmatprep.subr.mxu0 %v446
    %691 = vmatpush1.msra.mxu0 %v445
    %692 = vmatprep.subr.mxu0 %v449
    %693 = vmatpush1.msra.mxu0 %v448
    %694 = vmatprep.subr.mxu0 %v452
    %695 = vmatpush1.msra.mxu0 %v451
    %696 = vmatprep.subr.mxu0 %v455
    %697 = vmatpush1.msra.mxu0 %v454
    %698 = vmatprep.subr.mxu0 %v458
    %699 = vmatpush1.msra.mxu0 %v457
    %700 = vmatprep.subr.mxu0 %v461
    %701 = vmatpush1.msra.mxu0 %v460
    %702 = vmatprep.subr.mxu0 %v464
    %703 = vmatpush1.msra.mxu0 %v463
    %704 = vmatprep.subr.mxu0 %v467
    %705 = vmatpush1.msra.mxu0 %v466
    %706 = vmatprep.subr.mxu0 %v470
    %707 = vmatpush1.msra.mxu0 %v469
    %708 = vmatprep.subr.mxu0 %v473
    %709 = vmatpush1.msra.mxu0 %v472
    %710 = vmatprep.subr.mxu0 %v476
    %711 = vmatpush1.msra.mxu0 %v475
    %712 = vmatprep.subr.mxu0 %v479
    %713 = vmatpush1.msra.mxu0 %v478
    %714 = vmatprep.subr.mxu0 %v482
    %715 = vmatpush1.msra.mxu0 %v481
    %716 = vmatprep.subr.mxu0 %v485
    %717 = vmatpush1.msra.mxu0 %v484
    %718 = vmatprep.subr.mxu0 %v488
    %719 = vmatpush1.msra.mxu0 %v487
    %720 = vmatprep.subr.mxu0 %v491
    %721 = vmatpush1.msra.mxu0 %v490
    %722 = vmatprep.subr.mxu0 %v494
    %723 = vmatpush1.msra.mxu0 %v493
    %724 = vmatprep.subr.mxu0 %v497
    %725 = vmatpush1.msra.mxu0 %v496
    %726 = vmatprep.subr.mxu0 %v500
    %727 = vmatpush1.msra.mxu0 %v499
    %728 = vmatprep.subr.mxu0 %v503
    %729 = vmatpush1.msra.mxu0 %v502
    %730 = vmatprep.mubr.f32.mxu0 %v400
    %731 = vmatmul.mubr.f32.gmra.mrb[0].mxu0 %v399
    %v732 = vpop.f32.mrb[0].mxu0
    %v733 = vadd.f32 %v654, %v732
    %v734 = vpop.f32.mrb[0].mxu0
    %v735 = vadd.f32 %v658, %v734
    %736 = vmatprep.mubr.f32.mxu0 %v405
    %737 = vmatmul.mubr.f32.gmra.mrb[0].mxu0 %v404
    %v738 = vpop.f32.mrb[0].mxu0
    %v739 = vadd.f32 %v654, %v738
    %v740 = vpop.f32.mrb[0].mxu0
    %v741 = vadd.f32 %v658, %v740
    %742 = vdwg.mxu0
    %743 = vmatprep.subr.mxu0 %v506
    %744 = vmatpush1.msra.mxu0 %v505
    %745 = vmatprep.subr.mxu0 %v509
    %746 = vmatpush1.msra.mxu0 %v508
    %747 = vmatprep.subr.mxu0 %v512
    %748 = vmatpush1.msra.mxu0 %v511
    %749 = vmatprep.subr.mxu0 %v515
    %750 = vmatpush1.msra.mxu0 %v514
    %751 = vmatprep.subr.mxu0 %v518
    %752 = vmatpush1.msra.mxu0 %v517
    %753 = vmatprep.subr.mxu0 %v521
    %754 = vmatpush1.msra.mxu0 %v520
    %755 = vmatprep.subr.mxu0 %v524
    %756 = vmatpush1.msra.mxu0 %v523
    %757 = vmatprep.subr.mxu0 %v527
    %758 = vmatpush1.msra.mxu0 %v526
    %759 = vmatprep.subr.mxu0 %v530
    %760 = vmatpush1.msra.mxu0 %v529
    %761 = vmatprep.subr.mxu0 %v533
    %762 = vmatpush1.msra.mxu0 %v532
    %763 = vmatprep.subr.mxu0 %v536
    %764 = vmatpush1.msra.mxu0 %v535
    %765 = vmatprep.subr.mxu0 %v539
    %766 = vmatpush1.msra.mxu0 %v538
    %767 = vmatprep.subr.mxu0 %v542
    %768 = vmatpush1.msra.mxu0 %v541
    %769 = vmatprep.subr.mxu0 %v545
    %770 = vmatpush1.msra.mxu0 %v544
    %771 = vmatprep.subr.mxu0 %v548
    %772 = vmatpush1.msra.mxu0 %v547
    %773 = vmatprep.subr.mxu0 %v551
    %774 = vmatpush1.msra.mxu0 %v550
    %775 = vmatprep.subr.mxu0 %v554
    %776 = vmatpush1.msra.mxu0 %v553
    %777 = vmatprep.subr.mxu0 %v557
    %778 = vmatpush1.msra.mxu0 %v556
    %779 = vmatprep.subr.mxu0 %v560
    %780 = vmatpush1.msra.mxu0 %v559
    %781 = vmatprep.subr.mxu0 %v563
    %782 = vmatpush1.msra.mxu0 %v562
    %783 = vmatprep.subr.mxu0 %v566
    %784 = vmatpush1.msra.mxu0 %v565
    %785 = vmatprep.subr.mxu0 %v569
    %786 = vmatpush1.msra.mxu0 %v568
    %787 = vmatprep.subr.mxu0 %v572
    %788 = vmatpush1.msra.mxu0 %v571
    %789 = vmatprep.subr.mxu0 %v575
    %790 = vmatpush1.msra.mxu0 %v574
    %791 = vmatprep.subr.mxu0 %v578
    %792 = vmatpush1.msra.mxu0 %v577
    %793 = vmatprep.subr.mxu0 %v581
    %794 = vmatpush1.msra.mxu0 %v580
    %795 = vmatprep.subr.mxu0 %v584
    %796 = vmatpush1.msra.mxu0 %v583
    %797 = vmatprep.subr.mxu0 %v587
    %798 = vmatpush1.msra.mxu0 %v586
    %799 = vmatprep.subr.mxu0 %v590
    %800 = vmatpush1.msra.mxu0 %v589
    %801 = vmatprep.subr.mxu0 %v593
    %802 = vmatpush1.msra.mxu0 %v592
    %803 = vmatprep.subr.mxu0 %v596
    %804 = vmatpush1.msra.mxu0 %v595
    %805 = vmatprep.subr.mxu0 %v599
    %806 = vmatpush1.msra.mxu0 %v598
    %807 = vmatprep.mubr.f32.mxu0 %v402
    %808 = vmatmul.mubr.f32.gmra.mrb[0].mxu0 %v401
    %v809 = vpop.f32.mrb[0].mxu0
    %v810 = vadd.f32 %v733, %v809
    %v811 = vpop.f32.mrb[0].mxu0
    %v812 = vadd.f32 %v735, %v811
    %813 = vmatprep.mubr.f32.mxu0 %v407
    %814 = vmatmul.mubr.f32.gmra.mrb[0].mxu0 %v406
    %v815 = vpop.f32.mrb[0].mxu0
    %v816 = vadd.f32 %v739, %v815
    %v817 = vpop.f32.mrb[0].mxu0
    %v818 = vadd.f32 %v741, %v817
    %819 = vdwg.mxu0
    %820 = vmatprep.subr.mxu0 %v602
    %821 = vmatpush1.msra.mxu0 %v601
    %822 = vmatprep.subr.mxu0 %v605
    %823 = vmatpush1.msra.mxu0 %v604
    %824 = vmatprep.subr.mxu0 %v608
    %825 = vmatpush1.msra.mxu0 %v607
    %826 = vmatprep.subr.mxu0 %v611
    %827 = vmatpush1.msra.mxu0 %v610
    %828 = vmatprep.subr.mxu0 %v614
    %829 = vmatpush1.msra.mxu0 %v613
    %830 = vmatprep.subr.mxu0 %v617
    %831 = vmatpush1.msra.mxu0 %v616
    %832 = vmatprep.subr.mxu0 %v620
    %833 = vmatpush1.msra.mxu0 %v619
    %834 = vmatprep.subr.mxu0 %v623
    %835 = vmatpush1.msra.mxu0 %v622
    %836 = vmatprep.subr.mxu0 %v626
    %837 = vmatpush1.msra.mxu0 %v625
    %838 = vmatprep.subr.mxu0 %v629
    %839 = vmatpush1.msra.mxu0 %v628
    %840 = vmatprep.subr.mxu0 %v632
    %841 = vmatpush1.msra.mxu0 %v631
    %842 = vmatprep.subr.mxu0 %v635
    %843 = vmatpush1.msra.mxu0 %v634
    %844 = vmatprep.subr.mxu0 %v638
    %845 = vmatpush1.msra.mxu0 %v637
    %846 = vmatprep.subr.mxu0 %v641
    %847 = vmatpush1.msra.mxu0 %v640
    %848 = vmatprep.subr.mxu0 %v644
    %849 = vmatpush1.msra.mxu0 %v643
    %850 = vmatprep.subr.mxu0 %v647
    %851 = vmatpush1.msra.mxu0 %v646
    %852 = vmatprep.subr.mxu0 0.0
    %853 = vmatpush1.msra.mxu0 0.0
    %854 = vmatprep.subr.mxu0 0.0
    %855 = vmatpush1.msra.mxu0 0.0
    %856 = vmatprep.subr.mxu0 0.0
    %857 = vmatpush1.msra.mxu0 0.0
    %858 = vmatprep.subr.mxu0 0.0
    %859 = vmatpush1.msra.mxu0 0.0
    %860 = vmatprep.subr.mxu0 0.0
    %861 = vmatpush1.msra.mxu0 0.0
    %862 = vmatprep.subr.mxu0 0.0
    %863 = vmatpush1.msra.mxu0 0.0
    %864 = vmatprep.subr.mxu0 0.0
    %865 = vmatpush1.msra.mxu0 0.0
    %866 = vmatprep.subr.mxu0 0.0
    %867 = vmatpush1.msra.mxu0 0.0
    %868 = vmatprep.subr.mxu0 0.0
    %869 = vmatpush1.msra.mxu0 0.0
    %870 = vmatprep.subr.mxu0 0.0
    %871 = vmatpush1.msra.mxu0 0.0
    %872 = vmatprep.subr.mxu0 0.0
    %873 = vmatpush1.msra.mxu0 0.0
    %874 = vmatprep.subr.mxu0 0.0
    %875 = vmatpush1.msra.mxu0 0.0
    %876 = vmatprep.subr.mxu0 0.0
    %877 = vmatpush1.msra.mxu0 0.0
    %878 = vmatprep.subr.mxu0 0.0
    %879 = vmatpush1.msra.mxu0 0.0
    %880 = vmatprep.subr.mxu0 0.0
    %881 = vmatpush1.msra.mxu0 0.0
    %882 = vmatprep.subr.mxu0 0.0
    %883 = vmatpush1.msra.mxu0 0.0
    %884 = vmatprep.mubr.f32.mxu0 0.0
    %885 = vmatmul.mubr.f32.gmra.mrb[0].mxu0 %v403
    %v886 = vpop.f32.mrb[0].mxu0
    %v887 = vadd.f32 %v810, %v886
    %v888 = vpop.f32.mrb[0].mxu0
    %v889 = vadd.f32 %v812, %v888
    %890 = vmatprep.mubr.f32.mxu0 0.0
    %891 = vmatmul.mubr.f32.gmra.mrb[0].mxu0 %v408
    %v892 = vpop.f32.mrb[0].mxu0
    %v893 = vadd.f32 %v816, %v892
    %v894 = vpop.f32.mrb[0].mxu0
    %v895 = vadd.f32 %v818, %v894
    %896 = vdwg.mxu0
    %897 = vmatprep.subr.mxu0 0.0
    %898 = vmatpush1.msra.mxu0 %v411
    %899 = vmatprep.subr.mxu0 0.0
    %900 = vmatpush1.msra.mxu0 %v414
    %901 = vmatprep.subr.mxu0 0.0
    %902 = vmatpush1.msra.mxu0 %v417
    %903 = vmatprep.subr.mxu0 0.0
    %904 = vmatpush1.msra.mxu0 %v420
    %905 = vmatprep.subr.mxu0 0.0
    %906 = vmatpush1.msra.mxu0 %v423
    %907 = vmatprep.subr.mxu0 0.0
    %908 = vmatpush1.msra.mxu0 %v426
    %909 = vmatprep.subr.mxu0 0.0
    %910 = vmatpush1.msra.mxu0 %v429
    %911 = vmatprep.subr.mxu0 0.0
    %912 = vmatpush1.msra.mxu0 %v432
    %913 = vmatprep.subr.mxu0 0.0
    %914 = vmatpush1.msra.mxu0 %v435
    %915 = vmatprep.subr.mxu0 0.0
    %916 = vmatpush1.msra.mxu0 %v438
    %917 = vmatprep.subr.mxu0 0.0
    %918 = vmatpush1.msra.mxu0 %v441
    %919 = vmatprep.subr.mxu0 0.0
    %920 = vmatpush1.msra.mxu0 %v444
    %921 = vmatprep.subr.mxu0 0.0
    %922 = vmatpush1.msra.mxu0 %v447
    %923 = vmatprep.subr.mxu0 0.0
    %924 = vmatpush1.msra.mxu0 %v450
    %925 = vmatprep.subr.mxu0 0.0
    %926 = vmatpush1.msra.mxu0 %v453
    %927 = vmatprep.subr.mxu0 0.0
    %928 = vmatpush1.msra.mxu0 %v456
    %929 = vmatprep.subr.mxu0 0.0
    %930 = vmatpush1.msra.mxu0 %v459
    %931 = vmatprep.subr.mxu0 0.0
    %932 = vmatpush1.msra.mxu0 %v462
    %933 = vmatprep.subr.mxu0 0.0
    %934 = vmatpush1.msra.mxu0 %v465
    %935 = vmatprep.subr.mxu0 0.0
    %936 = vmatpush1.msra.mxu0 %v468
    %937 = vmatprep.subr.mxu0 0.0
    %938 = vmatpush1.msra.mxu0 %v471
    %939 = vmatprep.subr.mxu0 0.0
    %940 = vmatpush1.msra.mxu0 %v474
    %941 = vmatprep.subr.mxu0 0.0
    %942 = vmatpush1.msra.mxu0 %v477
    %943 = vmatprep.subr.mxu0 0.0
    %944 = vmatpush1.msra.mxu0 %v480
    %945 = vmatprep.subr.mxu0 0.0
    %946 = vmatpush1.msra.mxu0 %v483
    %947 = vmatprep.subr.mxu0 0.0
    %948 = vmatpush1.msra.mxu0 %v486
    %949 = vmatprep.subr.mxu0 0.0
    %950 = vmatpush1.msra.mxu0 %v489
    %951 = vmatprep.subr.mxu0 0.0
    %952 = vmatpush1.msra.mxu0 %v492
    %953 = vmatprep.subr.mxu0 0.0
    %954 = vmatpush1.msra.mxu0 %v495
    %955 = vmatprep.subr.mxu0 0.0
    %956 = vmatpush1.msra.mxu0 %v498
    %957 = vmatprep.subr.mxu0 0.0
    %958 = vmatpush1.msra.mxu0 %v501
    %959 = vmatprep.subr.mxu0 0.0
    %960 = vmatpush1.msra.mxu0 %v504
    %961 = vmatprep.mubr.f32.mxu0 %v400
    %962 = vmatmul.mubr.f32.gmra.mrb[0].mxu0 %v399
    %v963 = vpop.f32.mrb[0].mxu0
    %v964 = vadd.f32 %v662, %v963
    %v965 = vpop.f32.mrb[0].mxu0
    %966 = vmatprep.mubr.f32.mxu0 %v405
    %967 = vmatmul.mubr.f32.gmra.mrb[0].mxu0 %v404
    %v968 = vpop.f32.mrb[0].mxu0
    %v969 = vadd.f32 %v662, %v968
    %v970 = vpop.f32.mrb[0].mxu0
    %971 = vdwg.mxu0
    %972 = vmatprep.subr.mxu0 0.0
    %973 = vmatpush1.msra.mxu0 %v507
    %974 = vmatprep.subr.mxu0 0.0
    %975 = vmatpush1.msra.mxu0 %v510
    %976 = vmatprep.subr.mxu0 0.0
    %977 = vmatpush1.msra.mxu0 %v513
    %978 = vmatprep.subr.mxu0 0.0
    %979 = vmatpush1.msra.mxu0 %v516
    %980 = vmatprep.subr.mxu0 0.0
    %981 = vmatpush1.msra.mxu0 %v519
    %982 = vmatprep.subr.mxu0 0.0
    %983 = vmatpush1.msra.mxu0 %v522
    %984 = vmatprep.subr.mxu0 0.0
    %985 = vmatpush1.msra.mxu0 %v525
    %986 = vmatprep.subr.mxu0 0.0
    %987 = vmatpush1.msra.mxu0 %v528
    %988 = vmatprep.subr.mxu0 0.0
    %989 = vmatpush1.msra.mxu0 %v531
    %990 = vmatprep.subr.mxu0 0.0
    %991 = vmatpush1.msra.mxu0 %v534
    %992 = vmatprep.subr.mxu0 0.0
    %993 = vmatpush1.msra.mxu0 %v537
    %994 = vmatprep.subr.mxu0 0.0
    %995 = vmatpush1.msra.mxu0 %v540
    %996 = vmatprep.subr.mxu0 0.0
    %997 = vmatpush1.msra.mxu0 %v543
    %998 = vmatprep.subr.mxu0 0.0
    %999 = vmatpush1.msra.mxu0 %v546
    %1000 = vmatprep.subr.mxu0 0.0
    %1001 = vmatpush1.msra.mxu0 %v549
    %1002 = vmatprep.subr.mxu0 0.0
    %1003 = vmatpush1.msra.mxu0 %v552
    %1004 = vmatprep.subr.mxu0 0.0
    %1005 = vmatpush1.msra.mxu0 %v555
    %1006 = vmatprep.subr.mxu0 0.0
    %1007 = vmatpush1.msra.mxu0 %v558
    %1008 = vmatprep.subr.mxu0 0.0
    %1009 = vmatpush1.msra.mxu0 %v561
    %1010 = vmatprep.subr.mxu0 0.0
    %1011 = vmatpush1.msra.mxu0 %v564
    %1012 = vmatprep.subr.mxu0 0.0
    %1013 = vmatpush1.msra.mxu0 %v567
    %1014 = vmatprep.subr.mxu0 0.0
    %1015 = vmatpush1.msra.mxu0 %v570
    %1016 = vmatprep.subr.mxu0 0.0
    %1017 = vmatpush1.msra.mxu0 %v573
    %1018 = vmatprep.subr.mxu0 0.0
    %1019 = vmatpush1.msra.mxu0 %v576
    %1020 = vmatprep.subr.mxu0 0.0
    %1021 = vmatpush1.msra.mxu0 %v579
    %1022 = vmatprep.subr.mxu0 0.0
    %1023 = vmatpush1.msra.mxu0 %v582
    %1024 = vmatprep.subr.mxu0 0.0
    %1025 = vmatpush1.msra.mxu0 %v585
    %1026 = vmatprep.subr.mxu0 0.0
    %1027 = vmatpush1.msra.mxu0 %v588
    %1028 = vmatprep.subr.mxu0 0.0
    %1029 = vmatpush1.msra.mxu0 %v591
    %1030 = vmatprep.subr.mxu0 0.0
    %1031 = vmatpush1.msra.mxu0 %v594
    %1032 = vmatprep.subr.mxu0 0.0
    %1033 = vmatpush1.msra.mxu0 %v597
    %1034 = vmatprep.subr.mxu0 0.0
    %1035 = vmatpush1.msra.mxu0 %v600
    %1036 = vmatprep.mubr.f32.mxu0 %v402
    %1037 = vmatmul.mubr.f32.gmra.mrb[0].mxu0 %v401
    %v1038 = vpop.f32.mrb[0].mxu0
    %v1039 = vadd.f32 %v964, %v1038
    %v1040 = vpop.f32.mrb[0].mxu0
    %1041 = vmatprep.mubr.f32.mxu0 %v407
    %1042 = vmatmul.mubr.f32.gmra.mrb[0].mxu0 %v406
    %v1043 = vpop.f32.mrb[0].mxu0
    %v1044 = vadd.f32 %v969, %v1043
    %v1045 = vpop.f32.mrb[0].mxu0
    %1046 = vdwg.mxu0
    %1047 = vmatprep.subr.mxu0 0.0
    %1048 = vmatpush1.msra.mxu0 %v603
    %1049 = vmatprep.subr.mxu0 0.0
    %1050 = vmatpush1.msra.mxu0 %v606
    %1051 = vmatprep.subr.mxu0 0.0
    %1052 = vmatpush1.msra.mxu0 %v609
    %1053 = vmatprep.subr.mxu0 0.0
    %1054 = vmatpush1.msra.mxu0 %v612
    %1055 = vmatprep.subr.mxu0 0.0
    %1056 = vmatpush1.msra.mxu0 %v615
    %1057 = vmatprep.subr.mxu0 0.0
    %1058 = vmatpush1.msra.mxu0 %v618
    %1059 = vmatprep.subr.mxu0 0.0
    %1060 = vmatpush1.msra.mxu0 %v621
    %1061 = vmatprep.subr.mxu0 0.0
    %1062 = vmatpush1.msra.mxu0 %v624
    %1063 = vmatprep.subr.mxu0 0.0
    %1064 = vmatpush1.msra.mxu0 %v627
    %1065 = vmatprep.subr.mxu0 0.0
    %1066 = vmatpush1.msra.mxu0 %v630
    %1067 = vmatprep.subr.mxu0 0.0
    %1068 = vmatpush1.msra.mxu0 %v633
    %1069 = vmatprep.subr.mxu0 0.0
    %1070 = vmatpush1.msra.mxu0 %v636
    %1071 = vmatprep.subr.mxu0 0.0
    %1072 = vmatpush1.msra.mxu0 %v639
    %1073 = vmatprep.subr.mxu0 0.0
    %1074 = vmatpush1.msra.mxu0 %v642
    %1075 = vmatprep.subr.mxu0 0.0
    %1076 = vmatpush1.msra.mxu0 %v645
    %1077 = vmatprep.subr.mxu0 0.0
    %1078 = vmatpush1.msra.mxu0 %v648
    %1079 = vmatprep.subr.mxu0 0.0
    %1080 = vmatpush1.msra.mxu0 0.0
    %1081 = vmatprep.subr.mxu0 0.0
    %1082 = vmatpush1.msra.mxu0 0.0
    %1083 = vmatprep.subr.mxu0 0.0
    %1084 = vmatpush1.msra.mxu0 0.0
    %1085 = vmatprep.subr.mxu0 0.0
    %1086 = vmatpush1.msra.mxu0 0.0
    %1087 = vmatprep.subr.mxu0 0.0
    %1088 = vmatpush1.msra.mxu0 0.0
    %1089 = vmatprep.subr.mxu0 0.0
    %1090 = vmatpush1.msra.mxu0 0.0
    %1091 = vmatprep.subr.mxu0 0.0
    %1092 = vmatpush1.msra.mxu0 0.0
    %1093 = vmatprep.subr.mxu0 0.0
    %1094 = vmatpush1.msra.mxu0 0.0
    %1095 = vmatprep.subr.mxu0 0.0
    %1096 = vmatpush1.msra.mxu0 0.0
    %1097 = vmatprep.subr.mxu0 0.0
    %1098 = vmatpush1.msra.mxu0 0.0
    %1099 = vmatprep.subr.mxu0 0.0
    %1100 = vmatpush1.msra.mxu0 0.0
    %1101 = vmatprep.subr.mxu0 0.0
    %1102 = vmatpush1.msra.mxu0 0.0
    %1103 = vmatprep.subr.mxu0 0.0
    %1104 = vmatpush1.msra.mxu0 0.0
    %1105 = vmatprep.subr.mxu0 0.0
    %1106 = vmatpush1.msra.mxu0 0.0
    %1107 = vmatprep.subr.mxu0 0.0
    %1108 = vmatpush1.msra.mxu0 0.0
    %1109 = vmatprep.subr.mxu0 0.0
    %1110 = vmatpush1.msra.mxu0 0.0
    %1111 = vmatprep.mubr.f32.mxu0 0.0
    %1112 = vmatmul.mubr.f32.gmra.mrb[0].mxu0 %v403
    %v1113 = vpop.f32.mrb[0].mxu0
    %v1114 = vadd.f32 %v1039, %v1113
    %v1115 = vpop.f32.mrb[0].mxu0
    %1116 = vmatprep.mubr.f32.mxu0 0.0
    %1117 = vmatmul.mubr.f32.gmra.mrb[0].mxu0 %v408
    %v1118 = vpop.f32.mrb[0].mxu0
    %v1119 = vadd.f32 %v1044, %v1118
    %v1120 = vpop.f32.mrb[0].mxu0
    %1121 = vdwg.mxu0
    %v1122 = vmul.f32 %v887, 0.5
    %v1123 = vmul.f32 %v889, 0.5
    %v1124 = vmul.f32 %v1114, 0.5
    %v1125 = vmul.f32 %v893, 0.5
    %v1126 = vmul.f32 %v895, 0.5
    %v1127 = vmul.f32 %v1119, 0.5
    %v1128 = vmul.f32 %v887, 0.70710677
    %v1129 = vmul.f32 %v889, 0.70710677
    %v1130 = vmul.f32 %v1114, 0.70710677
    %v1131 = vmul.f32 %v893, 0.70710677
    %v1132 = vmul.f32 %v895, 0.70710677
    %v1133 = vmul.f32 %v1119, 0.70710677
    %v1134 = verf.f32.pop %v1128
    %v1135 = verf.f32.pop %v1129
    %v1136 = verf.f32.pop %v1130
    %v1137 = verf.f32.pop %v1131
    %v1138 = verf.f32.pop %v1132
    %v1139 = verf.f32.pop %v1133
    %v1140 = vadd.f32 %v1134, 1.0
    %v1141 = vadd.f32 %v1135, 1.0
    %v1142 = vadd.f32 %v1136, 1.0
    %v1143 = vadd.f32 %v1137, 1.0
    %v1144 = vadd.f32 %v1138, 1.0
    %v1145 = vadd.f32 %v1139, 1.0
    %v1146 = vmul.f32 %v1122, %v1140
    %v1147 = vmul.f32 %v1123, %v1141
    %v1148 = vmul.f32 %v1124, %v1142
    %v1149 = vmul.f32 %v1125, %v1143
    %v1150 = vmul.f32 %v1126, %v1144
    %v1151 = vmul.f32 %v1127, %v1145
    %1152 = vst [vmem:[#allocation2] sm:$0xff] %v1146
    %1153 = vst [vmem:[#allocation2 + $0x8] sm:$0xff] %v1147
    %1154 = vst [vmem:[#allocation2 + $0x10] sm:$0xff] %v1148
    %1155 = vst [vmem:[#allocation2 + $0x18] sm:$0xff] %v1149
    %1156 = vst [vmem:[#allocation2 + $0x20] sm:$0xff] %v1150
    %1157 = vst [vmem:[#allocation2 + $0x28] sm:$0xff] %v1151
    // Predicated region
    $region22: #{single_wvf_encoder_forward.1} parent=1 // pred_check
      _
    $region23: #{single_wvf_encoder_forward.1} parent=1 // pred_check_branch
      %1159 = sbr.rel (0) target = $region25
    $region24: #{single_wvf_encoder_forward.1} parent=1 // pred_region
      %s1161 = ssub.s32 768, 768
      %1162 = vsyncadd [#allocation3], %s1161
      %s1163 = sshll.u32 [#allocation2], 4
      %s1164 = int_to_ptr.vmem [resolvable:$true] %s1163
      %1169 = dma.vmem_to_hbm [thread:$0]  %s1164, 768, %s5, [#allocation3], 384, 384, 24
    $region25: #{single_wvf_encoder_forward.1} parent=1 // pred_fallthru
      _
    // Predicated region
    $region26: #{single_wvf_encoder_forward.1} parent=1 // pred_check
      _
    $region27: #{single_wvf_encoder_forward.1} parent=1 // pred_check_branch
      %1171 = sbr.rel (0) target = $region29
    $region28: #{single_wvf_encoder_forward.1} parent=1 // pred_region
      %1172 = dma.done [#allocation3], 768
    $region29: #{single_wvf_encoder_forward.1} parent=1 // pred_fallthru
      _
    %1173 = vsyncpa [#allocation3], 1

</llo_original>
